<compile_context>
chip_gen: v5e
topology: v5e:2x2
jax: 0.10.0
libtpu: 0.0.40
codegen_flags: <defaults>
</compile_context>

<pallas_src>
import jax
import jax.numpy as jnp
from jax.experimental import pallas as pl
from jax.experimental.pallas import tpu as pltpu

LANE = 128      # vreg lane width (fast axis)
SUBLANE = 8     # vreg sublane width
RESIDENT_FEAT_BYTES = 8 << 20   # budget for the double-buffered resident feature slab


# ------------------------------ small helpers ------------------------------ #
def _round_up(x, m):
    return (x + m - 1) // m * m


def _choose_tile(n_pad, target):
    """Largest multiple of 128 that divides n_pad and is <= target."""
    t = max(LANE, (min(target, n_pad) // LANE) * LANE)
    while n_pad % t:
        t -= LANE
    return t


def _pad2d(a, rows, cols, dtype):
    out = jnp.zeros((rows, cols), dtype)
    return out.at[: a.shape[0], : a.shape[1]].set(a.astype(dtype))


# --------------------- GCNConv layer kernel (per-node out) ------------------ #
def _make_gcn_conv_kernel(x_resident):
    def kernel(adj_ref, x_ref, w_ref, b_ref, out_ref, acc_ref):
        k = pl.program_id(1)
        tk = adj_ref.shape[1]

        @pl.when(k == 0)
        def _():
            acc_ref[...] = jnp.zeros_like(acc_ref)

        if x_resident:
            off = pl.multiple_of(k * tk, LANE)
            x_blk = x_ref[pl.ds(off, tk), :]      # slice the VMEM-resident features
        else:
            x_blk = x_ref[...]                    # streamed per reduction tile

        # Aggregate: acc[i] += A_hat[i, k] @ X[k]   (bf16 MXU operands, f32 accum)
        acc_ref[...] += jnp.dot(adj_ref[...], x_blk,
                                preferred_element_type=jnp.float32)

        @pl.when(k == pl.num_programs(1) - 1)
        def _():
            # Feature transform on MXU, bias add + ReLU in f32 on the VPU.
            h = jnp.dot(acc_ref[...].astype(jnp.bfloat16), w_ref[...],
                        preferred_element_type=jnp.float32)
            out_ref[...] = jnp.maximum(h + b_ref[...], 0.0).astype(out_ref.dtype)

    return kernel


def gcn_conv_layer(adj, x, w, b, *, tile_m=512, tile_k=512):
    """relu(A_hat @ X @ W + b) with a (row-tile, reduction-tile) grid."""
    n_pad = adj.shape[0]
    cin = x.shape[1]
    cout = w.shape[1]
    tm = _choose_tile(n_pad, tile_m)
    tk = _choose_tile(n_pad, tile_k)
    grid = (n_pad // tm, n_pad // tk)

    x_resident = 2 * n_pad * cin * 2 <= RESIDENT_FEAT_BYTES
    if x_resident:
        x_spec = pl.BlockSpec((n_pad, cin), lambda i, k: (0, 0))   # fetched once
        x_vmem = 2 * n_pad * cin * 2
        x_hbm = n_pad * cin * 2
    else:
        x_spec = pl.BlockSpec((tk, cin), lambda i, k: (k, 0))      # re-streamed per i
        x_vmem = 2 * tk * cin * 2
        x_hbm = grid[0] * n_pad * cin * 2

    flops = 2 * n_pad * n_pad * cin + 2 * n_pad * cin * cout
    bytes_accessed = 2 * adj.size + x_hbm + 2 * (w.size + n_pad * cout) + 4 * b.size
    vmem_need = (2 * tm * tk * 2 + x_vmem + 2 * cin * cout * 2
                 + 2 * cout * 4 + 2 * tm * cout * 2 + tm * cin * 4)
    vmem_limit = min(max(2 * vmem_need + (4 << 20), 16 << 20), 64 << 20)

    return pl.pallas_call(
        _make_gcn_conv_kernel(x_resident),
        out_shape=jax.ShapeDtypeStruct((n_pad, cout), jnp.bfloat16),
        grid_spec=pltpu.PrefetchScalarGridSpec(
            num_scalar_prefetch=0,
            grid=grid,
            in_specs=[
                pl.BlockSpec((tm, tk), lambda i, k: (i, k)),     # adj tile (streamed)
                x_spec,                                          # node features
                pl.BlockSpec((cin, cout), lambda i, k: (0, 0)),  # weights (resident)
                pl.BlockSpec((1, cout), lambda i, k: (0, 0)),    # bias (resident)
            ],
            out_specs=pl.BlockSpec((tm, cout), lambda i, k: (i, 0)),
            scratch_shapes=[pltpu.VMEM((tm, cin), jnp.float32)],
        ),
        compiler_params=pltpu.CompilerParams(
            dimension_semantics=("parallel", "arbitrary"),
            vmem_limit_bytes=int(vmem_limit),
        ),
        cost_estimate=pl.CostEstimate(flops=int(flops), transcendentals=0,
                                      bytes_accessed=int(bytes_accessed)),
    )(adj, x, w, b)


# ----------- fused: last GCNConv + ReLU + global_mean_pool + Linear --------- #
def _make_gcn_pool_lin_kernel(h_resident):
    def kernel(adj_ref, h_ref, w_ref, b_ref, pool_ref, wl_ref, bl_ref,
               out_ref, acc_h_ref, acc_p_ref):
        i = pl.program_id(0)
        k = pl.program_id(1)
        tk = adj_ref.shape[1]
        last_k = k == pl.num_programs(1) - 1

        @pl.when(jnp.logical_and(i == 0, k == 0))
        def _():
            acc_p_ref[...] = jnp.zeros_like(acc_p_ref)

        @pl.when(k == 0)
        def _():
            acc_h_ref[...] = jnp.zeros_like(acc_h_ref)

        if h_resident:
            off = pl.multiple_of(k * tk, LANE)
            h_blk = h_ref[pl.ds(off, tk), :]
        else:
            h_blk = h_ref[...]

        acc_h_ref[...] += jnp.dot(adj_ref[...], h_blk,
                                  preferred_element_type=jnp.float32)

        @pl.when(last_k)
        def _():
            # Finish the row tile: H2[i] = relu(acc @ W2 + b2), then fold it into
            # the pooled accumulator without ever writing H2 to HBM.
            h2 = jnp.dot(acc_h_ref[...].astype(jnp.bfloat16), w_ref[...],
                         preferred_element_type=jnp.float32)
            h2 = jnp.maximum(h2 + b_ref[...], 0.0)
            acc_p_ref[...] += jnp.dot(pool_ref[...], h2.astype(jnp.bfloat16),
                                      preferred_element_type=jnp.float32)

        @pl.when(jnp.logical_and(last_k, i == pl.num_programs(0) - 1))
        def _():
            # Tiny final projection in f32 for accuracy: (G,128)@(128,128).
            out_ref[...] = (jnp.dot(acc_p_ref[...], wl_ref[...].astype(jnp.float32),
                                    preferred_element_type=jnp.float32)
                            + bl_ref[...])

    return kernel


def gcn_pool_linear_layer(adj, h, w, b, pool, wl, bl, *, tile_m=512, tile_k=512):
    """(pool @ relu(A_hat @ H @ W + b)) @ Wl + bl as one fused kernel."""
    n_pad = adj.shape[0]
    cin = h.shape[1]
    cout = w.shape[1]
    g_pad = pool.shape[0]
    out_w = wl.shape[1]
    tm = _choose_tile(n_pad, tile_m)
    tk = _choose_tile(n_pad, tile_k)
    grid = (n_pad // tm, n_pad // tk)

    h_resident = 2 * n_pad * cin * 2 <= RESIDENT_FEAT_BYTES
    if h_resident:
        h_spec = pl.BlockSpec((n_pad, cin), lambda i, k: (0, 0))
        h_vmem = 2 * n_pad * cin * 2
        h_hbm = n_pad * cin * 2
    else:
        h_spec = pl.BlockSpec((tk, cin), lambda i, k: (k, 0))
        h_vmem = 2 * tk * cin * 2
        h_hbm = grid[0] * n_pad * cin * 2

    flops = (2 * n_pad * n_pad * cin + 2 * n_pad * cin * cout
             + 2 * g_pad * n_pad * cout + 2 * g_pad * cout * out_w)
    bytes_accessed = (2 * adj.size + h_hbm
                      + 2 * (w.size + pool.size + wl.size)
                      + 4 * (b.size + bl.size + g_pad * out_w))
    vmem_need = (2 * tm * tk * 2 + h_vmem + 2 * cin * cout * 2 + 2 * cout * 4
                 + 2 * g_pad * tm * 2 + 2 * cout * out_w * 2 + 2 * out_w * 4
                 + 2 * g_pad * out_w * 4 + tm * cin * 4 + g_pad * cout * 4)
    vmem_limit = min(max(2 * vmem_need + (4 << 20), 16 << 20), 64 << 20)

    return pl.pallas_call(
        _make_gcn_pool_lin_kernel(h_resident),
        out_shape=jax.ShapeDtypeStruct((g_pad, out_w), jnp.float32),
        grid_spec=pltpu.PrefetchScalarGridSpec(
            num_scalar_prefetch=0,
            grid=grid,
            in_specs=[
                pl.BlockSpec((tm, tk), lambda i, k: (i, k)),      # adj tile (streamed)
                h_spec,                                           # prev-layer features
                pl.BlockSpec((cin, cout), lambda i, k: (0, 0)),   # W2 (resident)
                pl.BlockSpec((1, cout), lambda i, k: (0, 0)),     # b2 (resident)
                pl.BlockSpec((g_pad, tm), lambda i, k: (0, i)),   # pool column tile
                pl.BlockSpec((cout, out_w), lambda i, k: (0, 0)), # Wl (resident)
                pl.BlockSpec((1, out_w), lambda i, k: (0, 0)),    # bl (resident)
            ],
            out_specs=pl.BlockSpec((g_pad, out_w), lambda i, k: (0, 0)),
            scratch_shapes=[pltpu.VMEM((tm, cin), jnp.float32),
                            pltpu.VMEM((g_pad, cout), jnp.float32)],
        ),
        compiler_params=pltpu.CompilerParams(
            # pooled accumulator spans the row-tile axis -> both axes arbitrary.
            dimension_semantics=("arbitrary", "arbitrary"),
            vmem_limit_bytes=int(vmem_limit),
        ),
        cost_estimate=pl.CostEstimate(flops=int(flops), transcendentals=0,
                                      bytes_accessed=int(bytes_accessed)),
    )(adj, h, w, b, pool, wl, bl)


# ------------------------------- JAX glue ---------------------------------- #
def build_normalized_adjacency(edge_index, num_nodes):
    """Dense A_hat = D^{-1/2}(A + I)D^{-1/2} (GCNConv default normalization)."""
    src, dst = edge_index
    a = jnp.zeros((num_nodes, num_nodes), jnp.float32)
    a = a.at[src, dst].set(1.0)
    # Force self-loops to exactly 1.0 even if edge_index already contains them.
    a = jnp.where(jnp.eye(num_nodes, dtype=bool), 1.0, a)
    deg = a.sum(axis=1)
    d_inv_sqrt = jnp.where(deg > 0, 1.0 / jnp.sqrt(deg), 0.0)
    return d_inv_sqrt[:, None] * a * d_inv_sqrt[None, :]


def build_pool_matrix(batch, num_graphs):
    """(G, N) matrix implementing global_mean_pool."""
    onehot = (batch[None, :] == jnp.arange(num_graphs)[:, None]).astype(jnp.float32)
    counts = onehot.sum(axis=1, keepdims=True)
    return onehot / jnp.maximum(counts, 1.0)


def mygcn_forward(x, edge_index, batch, params, num_graphs,
                  *, tile_m=512, tile_k=512):
    """Full MyGCN forward: (L-1)x GCNConv+ReLU -> fused [GCNConv+ReLU+pool+Linear]."""
    *conv_params, wl, bl = params
    ws = conv_params[0::2]
    bs = conv_params[1::2]
    num_layers = len(ws)

    n, _ = x.shape
    n_pad = _round_up(n, LANE)
    g_pad = _round_up(num_graphs, SUBLANE)
    out_pad = LANE  # lane-dense output slab; real scalar lives in column 0

    adj = build_normalized_adjacency(edge_index, n)
    pool = build_pool_matrix(batch, num_graphs)

    # Pad to lane/sublane multiples and cast MXU operands to bf16 (zero padding
    # keeps the math exact: padded rows/cols of adj/pool are zero so padded-node
    # garbage never reaches real outputs).
    adj_p = _pad2d(adj, n_pad, n_pad, jnp.bfloat16)
    pool_p = _pad2d(pool, g_pad, n_pad, jnp.bfloat16)
    dims_pad = [_round_up(x.shape[1], LANE)] + [_round_up(w.shape[1], LANE) for w in ws]
    w_p = [_pad2d(ws[i], dims_pad[i], dims_pad[i + 1], jnp.bfloat16)
           for i in range(num_layers)]
    b_p = [_pad2d(bs[i], 1, dims_pad[i + 1], jnp.float32) for i in range(num_layers)]
    wl_p = _pad2d(wl, dims_pad[-1], out_pad, jnp.bfloat16)
    bl_p = _pad2d(bl, 1, out_pad, jnp.float32)

    feats = _pad2d(x, n_pad, dims_pad[0], jnp.bfloat16)
    for li in range(num_layers - 1):
        feats = gcn_conv_layer(adj_p, feats, w_p[li], b_p[li],
                               tile_m=tile_m, tile_k=tile_k)
    out = gcn_pool_linear_layer(adj_p, feats, w_p[-1], b_p[-1],
                                pool_p, wl_p, bl_p,
                                tile_m=tile_m, tile_k=tile_k)
    return out[:num_graphs, :1]


def init_params(key, input_channels, mp_layers):
    """Glorot-uniform weights, small uniform biases, matching module shapes."""
    params = []
    dims = [input_channels] + list(mp_layers)
    for i in range(len(mp_layers)):
        key, wk, bk = jax.random.split(key, 3)
        fan_in, fan_out = dims[i], dims[i + 1]
        limit = jnp.sqrt(6.0 / (fan_in + fan_out))
        w = jax.random.uniform(wk, (fan_in, fan_out), jnp.float32, -limit, limit)
        b = jax.random.uniform(bk, (1, fan_out), jnp.float32, -0.1, 0.1)
        params.extend([w, b])
    key, wk, bk = jax.random.split(key, 3)
    limit = jnp.sqrt(6.0 / (mp_layers[-1] + 1))
    wl = jax.random.uniform(wk, (mp_layers[-1], 1), jnp.float32, -limit, limit)
    bl = jax.random.uniform(bk, (1, 1), jnp.float32, -0.1, 0.1)
    params.extend([wl, bl])
    return tuple(params)


def reference_forward(adj, pool, x, params):
    (w1, b1, w2, b2, wl, bl) = params
    h = jnp.maximum(adj @ x @ w1 + b1, 0.0)
    h = jnp.maximum(adj @ h @ w2 + b2, 0.0)
    return pool @ h @ wl + bl


# --------------------------------- main ------------------------------------ #
if __name__ == "__main__":
    key = jax.random.PRNGKey(0)

    # Two ring graphs of 8 nodes each -> N = 16 nodes total, 2 graphs.
    nodes_per_graph = 8
    num_graphs = 2
    num_nodes = nodes_per_graph * num_graphs
    input_channels = 4
    mp_layers = (32, 32)

    srcs, dsts = [], []
    for g in range(num_graphs):
        base = g * nodes_per_graph
        for i in range(nodes_per_graph):
            u = base + i
            v = base + (i + 1) % nodes_per_graph
            srcs += [u, v]          # undirected: both directions
            dsts += [v, u]
    edge_index = jnp.array([srcs, dsts], dtype=jnp.int32)
    batch = jnp.repeat(jnp.arange(num_graphs, dtype=jnp.int32), nodes_per_graph)

    key, xk = jax.random.split(key)
    x = jax.random.normal(xk, (num_nodes, input_channels), jnp.float32)
    params = init_params(key, input_channels, mp_layers)

    fwd = jax.jit(mygcn_forward, static_argnums=(4,))
    out = fwd(x, edge_index, batch, params, num_graphs)
    out = jax.block_until_ready(out)

    adj = build_normalized_adjacency(edge_index, num_nodes)
    pool = build_pool_matrix(batch, num_graphs)
    ref = reference_forward(adj, pool, x, params)

    assert out.shape == (num_graphs, 1), out.shape
    # bf16 MXU operands with f32 accumulation -> relaxed tolerance vs f32 ref.
    assert jnp.allclose(out, ref, atol=5e-2, rtol=5e-2), (out, ref)

    print("KERNEL_OK")
</pallas_src>

<mosaic_0001>
module attributes {stable_mosaic.version = 11 : i64} {
  func.func @kernel(%arg0: i32, %arg1: i32, %arg2: memref<128x128xbf16, #tpu.memory_space<vmem>>, %arg3: memref<128x128xbf16, #tpu.memory_space<vmem>>, %arg4: memref<128x128xbf16, #tpu.memory_space<vmem>>, %arg5: memref<1x128xf32, #tpu.memory_space<vmem>>, %arg6: memref<128x128xbf16, #tpu.memory_space<vmem>>, %arg7: memref<128x128xf32, #tpu.memory_space<vmem>>) attributes {dimension_semantics = [#tpu.dimension_semantics<parallel>, #tpu.dimension_semantics<arbitrary>], iteration_bounds = array<i64: 1, 1>, scalar_prefetch = 0 : i64, scratch_operands = 1 : i64, tpu.core_type = #tpu.core_type<tc>, window_params = [{transform_indices = @transform_0, window_bounds = array<i64: 128, 128>}, {pipeline_mode = #tpu.pipeline_mode<synchronous>, transform_indices = @transform_1, window_bounds = array<i64: 128, 128>}, {pipeline_mode = #tpu.pipeline_mode<synchronous>, transform_indices = @transform_2, window_bounds = array<i64: 128, 128>}, {pipeline_mode = #tpu.pipeline_mode<synchronous>, transform_indices = @transform_3, window_bounds = array<i64: 1, 128>}, {transform_indices = @transform_4, window_bounds = array<i64: 128, 128>}]} {
    %c0_i32 = arith.constant 0 : i32
    %0 = arith.cmpi eq, %arg1, %c0_i32 : i32
    %1 = arith.extui %0 : i1 to i32
    %c0_i32_0 = arith.constant 0 : i32
    %2 = arith.cmpi ne, %1, %c0_i32_0 : i32
    scf.if %2 {
      %cst_9 = arith.constant 0.000000e+00 : f32
      %15 = vector.broadcast %cst_9 : f32 to vector<128x128xf32>
      %c0_10 = arith.constant 0 : index
      %c0_11 = arith.constant 0 : index
      %16 = vector.load %arg7[%c0_10, %c0_11] : memref<128x128xf32, #tpu.memory_space<vmem>>, vector<128x128xf32>
      tpu.vector_store %arg7[%c0_10, %c0_11], %15 {strides = array<i32>} : memref<128x128xf32, #tpu.memory_space<vmem>>, vector<128x128xf32>,
    } else {
    }
    %c128_i32 = arith.constant 128 : i32
    %3 = arith.muli %arg1, %c128_i32 : i32
    %4 = tpu.assume_multiple %3, 128 : i32
    %5 = arith.index_cast %4 : i32 to index
    %c0 = arith.constant 0 : index
    %6 = vector.load %arg3[%5, %c0] : memref<128x128xbf16, #tpu.memory_space<vmem>>, vector<128x128xbf16>
    %c0_1 = arith.constant 0 : index
    %c0_2 = arith.constant 0 : index
    %7 = vector.load %arg7[%c0_1, %c0_2] : memref<128x128xf32, #tpu.memory_space<vmem>>, vector<128x128xf32>
    %c0_3 = arith.constant 0 : index
    %c0_4 = arith.constant 0 : index
    %8 = vector.load %arg2[%c0_3, %c0_4] : memref<128x128xbf16, #tpu.memory_space<vmem>>, vector<128x128xbf16>
    %cst = arith.constant dense<0.000000e+00> : vector<128x128xf32>
    %9 = tpu.matmul %8, %6, %cst {dimension_numbers = #tpu.dot_dimension_numbers<[1], [0], [0], [1], [0, 0, 1, 1], [], []>} : vector<128x128xbf16>, vector<128x128xbf16>, vector<128x128xf32> -> vector<128x128xf32>
    %10 = arith.addf %7, %9 : vector<128x128xf32>
    %c0_5 = arith.constant 0 : index
    %c0_6 = arith.constant 0 : index
    %11 = vector.load %arg7[%c0_5, %c0_6] : memref<128x128xf32, #tpu.memory_space<vmem>>, vector<128x128xf32>
    tpu.vector_store %arg7[%c0_5, %c0_6], %10 {strides = array<i32>} : memref<128x128xf32, #tpu.memory_space<vmem>>, vector<128x128xf32>,
    %c0_i32_7 = arith.constant 0 : i32
    %12 = arith.cmpi eq, %arg1, %c0_i32_7 : i32
    %13 = arith.extui %12 : i1 to i32
    %c0_i32_8 = arith.constant 0 : i32
    %14 = arith.cmpi ne, %13, %c0_i32_8 : i32
    scf.if %14 {
      %c0_9 = arith.constant 0 : index
      %c0_10 = arith.constant 0 : index
      %15 = vector.load %arg7[%c0_9, %c0_10] : memref<128x128xf32, #tpu.memory_space<vmem>>, vector<128x128xf32>
      %16 = arith.truncf %15 : vector<128x128xf32> to vector<128x128xbf16>
      %c0_11 = arith.constant 0 : index
      %c0_12 = arith.constant 0 : index
      %17 = vector.load %arg4[%c0_11, %c0_12] : memref<128x128xbf16, #tpu.memory_space<vmem>>, vector<128x128xbf16>
      %cst_13 = arith.constant dense<0.000000e+00> : vector<128x128xf32>
      %18 = tpu.matmul %16, %17, %cst_13 {dimension_numbers = #tpu.dot_dimension_numbers<[1], [0], [0], [1], [0, 0, 1, 1], [], []>} : vector<128x128xbf16>, vector<128x128xbf16>, vector<128x128xf32> -> vector<128x128xf32>
      %c0_14 = arith.constant 0 : index
      %c0_15 = arith.constant 0 : index
      %19 = vector.load %arg5[%c0_14, %c0_15] : memref<1x128xf32, #tpu.memory_space<vmem>>, vector<1x128xf32>
      %20 = vector.broadcast %19 : vector<1x128xf32> to vector<128x128xf32>
      %21 = arith.addf %18, %20 : vector<128x128xf32>
      %cst_16 = arith.constant 0.000000e+00 : f32
      %22 = vector.broadcast %cst_16 : f32 to vector<128x128xf32>
      %23 = arith.maximumf %21, %22 : vector<128x128xf32>
      %24 = arith.truncf %23 : vector<128x128xf32> to vector<128x128xbf16>
      %c0_17 = arith.constant 0 : index
      %c0_18 = arith.constant 0 : index
      %25 = vector.load %arg6[%c0_17, %c0_18] : memref<128x128xbf16, #tpu.memory_space<vmem>>, vector<128x128xbf16>
      tpu.vector_store %arg6[%c0_17, %c0_18], %24 {strides = array<i32>} : memref<128x128xbf16, #tpu.memory_space<vmem>>, vector<128x128xbf16>,
    } else {
    }
    return
  }
  func.func @transform_0(%arg0: i32, %arg1: i32) -> (i32, i32) {
    %c0_i32 = arith.constant 0 : i32
    return %arg0, %arg1 : i32, i32
  }
  func.func @transform_1(%arg0: i32, %arg1: i32) -> (i32, i32) {
    %c0_i32 = arith.constant 0 : i32
    %c0_i32_0 = arith.constant 0 : i32
    %c0_i32_1 = arith.constant 0 : i32
    return %c0_i32, %c0_i32_0 : i32, i32
  }
  func.func @transform_2(%arg0: i32, %arg1: i32) -> (i32, i32) {
    %c0_i32 = arith.constant 0 : i32
    %c0_i32_0 = arith.constant 0 : i32
    %c0_i32_1 = arith.constant 0 : i32
    return %c0_i32, %c0_i32_0 : i32, i32
  }
  func.func @transform_3(%arg0: i32, %arg1: i32) -> (i32, i32) {
    %c0_i32 = arith.constant 0 : i32
    %c0_i32_0 = arith.constant 0 : i32
    %c0_i32_1 = arith.constant 0 : i32
    return %c0_i32, %c0_i32_0 : i32, i32
  }
  func.func @transform_4(%arg0: i32, %arg1: i32) -> (i32, i32) {
    %c0_i32 = arith.constant 0 : i32
    %c0_i32_0 = arith.constant 0 : i32
    return %arg0, %c0_i32 : i32, i32
  }
}

module attributes {stable_mosaic.version = 11 : i64} {
  func.func @kernel(%arg0: i32, %arg1: i32, %arg2: memref<128x128xbf16, #tpu.memory_space<vmem>>, %arg3: memref<128x128xbf16, #tpu.memory_space<vmem>>, %arg4: memref<128x128xbf16, #tpu.memory_space<vmem>>, %arg5: memref<1x128xf32, #tpu.memory_space<vmem>>, %arg6: memref<8x128xbf16, #tpu.memory_space<vmem>>, %arg7: memref<128x128xbf16, #tpu.memory_space<vmem>>, %arg8: memref<1x128xf32, #tpu.memory_space<vmem>>, %arg9: memref<8x128xf32, #tpu.memory_space<vmem>>, %arg10: memref<128x128xf32, #tpu.memory_space<vmem>>, %arg11: memref<8x128xf32, #tpu.memory_space<vmem>>) attributes {dimension_semantics = [#tpu.dimension_semantics<arbitrary>, #tpu.dimension_semantics<arbitrary>], iteration_bounds = array<i64: 1, 1>, scalar_prefetch = 0 : i64, scratch_operands = 2 : i64, tpu.core_type = #tpu.core_type<tc>, window_params = [{transform_indices = @transform_0, window_bounds = array<i64: 128, 128>}, {pipeline_mode = #tpu.pipeline_mode<synchronous>, transform_indices = @transform_1, window_bounds = array<i64: 128, 128>}, {pipeline_mode = #tpu.pipeline_mode<synchronous>, transform_indices = @transform_2, window_bounds = array<i64: 128, 128>}, {pipeline_mode = #tpu.pipeline_mode<synchronous>, transform_indices = @transform_3, window_bounds = array<i64: 1, 128>}, {transform_indices = @transform_4, window_bounds = array<i64: 8, 128>}, {pipeline_mode = #tpu.pipeline_mode<synchronous>, transform_indices = @transform_5, window_bounds = array<i64: 128, 128>}, {pipeline_mode = #tpu.pipeline_mode<synchronous>, transform_indices = @transform_6, window_bounds = array<i64: 1, 128>}, {pipeline_mode = #tpu.pipeline_mode<synchronous>, transform_indices = @transform_7, window_bounds = array<i64: 8, 128>}]} {
    %c0_i32 = arith.constant 0 : i32
    %0 = arith.cmpi eq, %arg1, %c0_i32 : i32
    %c0_i32_0 = arith.constant 0 : i32
    %1 = arith.cmpi eq, %arg0, %c0_i32_0 : i32
    %c0_i32_1 = arith.constant 0 : i32
    %2 = arith.cmpi eq, %arg1, %c0_i32_1 : i32
    %3 = arith.andi %1, %2 : i1
    %4 = arith.extui %3 : i1 to i32
    %c0_i32_2 = arith.constant 0 : i32
    %5 = arith.cmpi ne, %4, %c0_i32_2 : i32
    scf.if %5 {
      %cst_14 = arith.constant 0.000000e+00 : f32
      %24 = vector.broadcast %cst_14 : f32 to vector<8x128xf32>
      %c0_15 = arith.constant 0 : index
      %c0_16 = arith.constant 0 : index
      %25 = vector.load %arg11[%c0_15, %c0_16] : memref<8x128xf32, #tpu.memory_space<vmem>>, vector<8x128xf32>
      tpu.vector_store %arg11[%c0_15, %c0_16], %24 {strides = array<i32>} : memref<8x128xf32, #tpu.memory_space<vmem>>, vector<8x128xf32>,
    } else {
    }
    %c0_i32_3 = arith.constant 0 : i32
    %6 = arith.cmpi eq, %arg1, %c0_i32_3 : i32
    %7 = arith.extui %6 : i1 to i32
    %c0_i32_4 = arith.constant 0 : i32
    %8 = arith.cmpi ne, %7, %c0_i32_4 : i32
    scf.if %8 {
      %cst_14 = arith.constant 0.000000e+00 : f32
      %24 = vector.broadcast %cst_14 : f32 to vector<128x128xf32>
      %c0_15 = arith.constant 0 : index
      %c0_16 = arith.constant 0 : index
      %25 = vector.load %arg10[%c0_15, %c0_16] : memref<128x128xf32, #tpu.memory_space<vmem>>, vector<128x128xf32>
      tpu.vector_store %arg10[%c0_15, %c0_16], %24 {strides = array<i32>} : memref<128x128xf32, #tpu.memory_space<vmem>>, vector<128x128xf32>,
    } else {
    }
    %c128_i32 = arith.constant 128 : i32
    %9 = arith.muli %arg1, %c128_i32 : i32
    %10 = tpu.assume_multiple %9, 128 : i32
    %11 = arith.index_cast %10 : i32 to index
    %c0 = arith.constant 0 : index
    %12 = vector.load %arg3[%11, %c0] : memref<128x128xbf16, #tpu.memory_space<vmem>>, vector<128x128xbf16>
    %c0_5 = arith.constant 0 : index
    %c0_6 = arith.constant 0 : index
    %13 = vector.load %arg10[%c0_5, %c0_6] : memref<128x128xf32, #tpu.memory_space<vmem>>, vector<128x128xf32>
    %c0_7 = arith.constant 0 : index
    %c0_8 = arith.constant 0 : index
    %14 = vector.load %arg2[%c0_7, %c0_8] : memref<128x128xbf16, #tpu.memory_space<vmem>>, vector<128x128xbf16>
    %cst = arith.constant dense<0.000000e+00> : vector<128x128xf32>
    %15 = tpu.matmul %14, %12, %cst {dimension_numbers = #tpu.dot_dimension_numbers<[1], [0], [0], [1], [0, 0, 1, 1], [], []>} : vector<128x128xbf16>, vector<128x128xbf16>, vector<128x128xf32> -> vector<128x128xf32>
    %16 = arith.addf %13, %15 : vector<128x128xf32>
    %c0_9 = arith.constant 0 : index
    %c0_10 = arith.constant 0 : index
    %17 = vector.load %arg10[%c0_9, %c0_10] : memref<128x128xf32, #tpu.memory_space<vmem>>, vector<128x128xf32>
    tpu.vector_store %arg10[%c0_9, %c0_10], %16 {strides = array<i32>} : memref<128x128xf32, #tpu.memory_space<vmem>>, vector<128x128xf32>,
    %18 = arith.extui %0 : i1 to i32
    %c0_i32_11 = arith.constant 0 : i32
    %19 = arith.cmpi ne, %18, %c0_i32_11 : i32
    scf.if %19 {
      %c0_14 = arith.constant 0 : index
      %c0_15 = arith.constant 0 : index
      %24 = vector.load %arg10[%c0_14, %c0_15] : memref<128x128xf32, #tpu.memory_space<vmem>>, vector<128x128xf32>
      %25 = arith.truncf %24 : vector<128x128xf32> to vector<128x128xbf16>
      %c0_16 = arith.constant 0 : index
      %c0_17 = arith.constant 0 : index
      %26 = vector.load %arg4[%c0_16, %c0_17] : memref<128x128xbf16, #tpu.memory_space<vmem>>, vector<128x128xbf16>
      %cst_18 = arith.constant dense<0.000000e+00> : vector<128x128xf32>
      %27 = tpu.matmul %25, %26, %cst_18 {dimension_numbers = #tpu.dot_dimension_numbers<[1], [0], [0], [1], [0, 0, 1, 1], [], []>} : vector<128x128xbf16>, vector<128x128xbf16>, vector<128x128xf32> -> vector<128x128xf32>
      %c0_19 = arith.constant 0 : index
      %c0_20 = arith.constant 0 : index
      %28 = vector.load %arg5[%c0_19, %c0_20] : memref<1x128xf32, #tpu.memory_space<vmem>>, vector<1x128xf32>
      %29 = vector.broadcast %28 : vector<1x128xf32> to vector<128x128xf32>
      %30 = arith.addf %27, %29 : vector<128x128xf32>
      %cst_21 = arith.constant 0.000000e+00 : f32
      %31 = vector.broadcast %cst_21 : f32 to vector<128x128xf32>
      %32 = arith.maximumf %30, %31 : vector<128x128xf32>
      %c0_22 = arith.constant 0 : index
      %c0_23 = arith.constant 0 : index
      %33 = vector.load %arg11[%c0_22, %c0_23] : memref<8x128xf32, #tpu.memory_space<vmem>>, vector<8x128xf32>
      %c0_24 = arith.constant 0 : index
      %c0_25 = arith.constant 0 : index
      %34 = vector.load %arg6[%c0_24, %c0_25] : memref<8x128xbf16, #tpu.memory_space<vmem>>, vector<8x128xbf16>
      %35 = arith.truncf %32 : vector<128x128xf32> to vector<128x128xbf16>
      %cst_26 = arith.constant dense<0.000000e+00> : vector<8x128xf32>
      %36 = tpu.matmul %34, %35, %cst_26 {dimension_numbers = #tpu.dot_dimension_numbers<[1], [0], [0], [1], [0, 0, 1, 1], [], []>} : vector<8x128xbf16>, vector<128x128xbf16>, vector<8x128xf32> -> vector<8x128xf32>
      %37 = arith.addf %33, %36 : vector<8x128xf32>
      %c0_27 = arith.constant 0 : index
      %c0_28 = arith.constant 0 : index
      %38 = vector.load %arg11[%c0_27, %c0_28] : memref<8x128xf32, #tpu.memory_space<vmem>>, vector<8x128xf32>
      tpu.vector_store %arg11[%c0_27, %c0_28], %37 {strides = array<i32>} : memref<8x128xf32, #tpu.memory_space<vmem>>, vector<8x128xf32>,
    } else {
    }
    %c0_i32_12 = arith.constant 0 : i32
    %20 = arith.cmpi eq, %arg0, %c0_i32_12 : i32
    %21 = arith.andi %0, %20 : i1
    %22 = arith.extui %21 : i1 to i32
    %c0_i32_13 = arith.constant 0 : i32
    %23 = arith.cmpi ne, %22, %c0_i32_13 : i32
    scf.if %23 {
      %c0_14 = arith.constant 0 : index
      %c0_15 = arith.constant 0 : index
      %24 = vector.load %arg11[%c0_14, %c0_15] : memref<8x128xf32, #tpu.memory_space<vmem>>, vector<8x128xf32>
      %c0_16 = arith.constant 0 : index
      %c0_17 = arith.constant 0 : index
      %25 = vector.load %arg7[%c0_16, %c0_17] : memref<128x128xbf16, #tpu.memory_space<vmem>>, vector<128x128xbf16>
      %26 = arith.extf %25 : vector<128x128xbf16> to vector<128x128xf32>
      %cst_18 = arith.constant dense<0.000000e+00> : vector<8x128xf32>
      %27 = tpu.matmul %24, %26, %cst_18 {dimension_numbers = #tpu.dot_dimension_numbers<[1], [0], [0], [1], [0, 0, 1, 1], [], []>} : vector<8x128xf32>, vector<128x128xf32>, vector<8x128xf32> -> vector<8x128xf32>
      %c0_19 = arith.constant 0 : index
      %c0_20 = arith.constant 0 : index
      %28 = vector.load %arg8[%c0_19, %c0_20] : memref<1x128xf32, #tpu.memory_space<vmem>>, vector<1x128xf32>
      %29 = vector.broadcast %28 : vector<1x128xf32> to vector<8x128xf32>
      %30 = arith.addf %27, %29 : vector<8x128xf32>
      %c0_21 = arith.constant 0 : index
      %c0_22 = arith.constant 0 : index
      %31 = vector.load %arg9[%c0_21, %c0_22] : memref<8x128xf32, #tpu.memory_space<vmem>>, vector<8x128xf32>
      tpu.vector_store %arg9[%c0_21, %c0_22], %30 {strides = array<i32>} : memref<8x128xf32, #tpu.memory_space<vmem>>, vector<8x128xf32>,
    } else {
    }
    return
  }
  func.func @transform_0(%arg0: i32, %arg1: i32) -> (i32, i32) {
    %c0_i32 = arith.constant 0 : i32
    return %arg0, %arg1 : i32, i32
  }
  func.func @transform_1(%arg0: i32, %arg1: i32) -> (i32, i32) {
    %c0_i32 = arith.constant 0 : i32
    %c0_i32_0 = arith.constant 0 : i32
    %c0_i32_1 = arith.constant 0 : i32
    return %c0_i32, %c0_i32_0 : i32, i32
  }
  func.func @transform_2(%arg0: i32, %arg1: i32) -> (i32, i32) {
    %c0_i32 = arith.constant 0 : i32
    %c0_i32_0 = arith.constant 0 : i32
    %c0_i32_1 = arith.constant 0 : i32
    return %c0_i32, %c0_i32_0 : i32, i32
  }
  func.func @transform_3(%arg0: i32, %arg1: i32) -> (i32, i32) {
    %c0_i32 = arith.constant 0 : i32
    %c0_i32_0 = arith.constant 0 : i32
    %c0_i32_1 = arith.constant 0 : i32
    return %c0_i32, %c0_i32_0 : i32, i32
  }
  func.func @transform_4(%arg0: i32, %arg1: i32) -> (i32, i32) {
    %c0_i32 = arith.constant 0 : i32
    %c0_i32_0 = arith.constant 0 : i32
    return %c0_i32, %arg0 : i32, i32
  }
  func.func @transform_5(%arg0: i32, %arg1: i32) -> (i32, i32) {
    %c0_i32 = arith.constant 0 : i32
    %c0_i32_0 = arith.constant 0 : i32
    %c0_i32_1 = arith.constant 0 : i32
    return %c0_i32, %c0_i32_0 : i32, i32
  }
  func.func @transform_6(%arg0: i32, %arg1: i32) -> (i32, i32) {
    %c0_i32 = arith.constant 0 : i32
    %c0_i32_0 = arith.constant 0 : i32
    %c0_i32_1 = arith.constant 0 : i32
    return %c0_i32, %c0_i32_0 : i32, i32
  }
  func.func @transform_7(%arg0: i32, %arg1: i32) -> (i32, i32) {
    %c0_i32 = arith.constant 0 : i32
    %c0_i32_0 = arith.constant 0 : i32
    %c0_i32_1 = arith.constant 0 : i32
    return %c0_i32, %c0_i32_0 : i32, i32
  }
}

</mosaic_0001>

<llo_original>
// kernel: mygcn_forward.2
$region0: #{mygcn_forward.2}
  #allocation0 [shape = 'u32[]', space=smem, size = 0x4, offset = 0x4, fixed_abs, tag = 'smem constant byte address 0x4 - core index']
  #allocation1 [shape = 'u32[72,128]{1,0:T(1,128)}', space=vmem, size = 0x9000, scoped, tag = 'internal scratch']
  #allocation2 [shape = 'f32[128,128]{1,0:T(8,128)}', space=vmem, size = 0x10000, scoped, tag = 'scratch operand']
  %s0 = inlined_call_operand.vmem [shape: bf16[128,128], index: 0, kind: input, shape index: {}]
  %s1 = inlined_call_operand.vmem [shape: bf16[128,128], index: 1, kind: input, shape index: {}]
  %s2 = inlined_call_operand.vmem [shape: bf16[128,128], index: 2, kind: input, shape index: {}]
  %s3 = inlined_call_operand.vmem [shape: f32[1,128], index: 3, kind: input, shape index: {}]
  %s4 = inlined_call_operand.vmem [shape: bf16[128,128], index: 4, kind: output, shape index: {}]
  %s5 = sld [smem:[#allocation0]]
  $region34: #{mygcn_forward.2} parent=0
    _
  %s7 = ssub.s32 1, %s5
  %s8 = scalar_select 0, %s7, %s5
  // Predicated region
  $region2: #{mygcn_forward.2} parent=0 // pred_check
    _
  $region3: #{mygcn_forward.2} parent=0 // pred_check_branch
    %10 = sbr.rel (0) target = $region5
  $region4: #{mygcn_forward.2} parent=0 // pred_region
    _
  $region5: #{mygcn_forward.2} parent=0 // pred_fallthru
    _
  // Predicated region
  $region6: #{mygcn_forward.2} parent=0 // pred_check
    _
  $region7: #{mygcn_forward.2} parent=0 // pred_check_branch
    %12 = sbr.rel (0) target = $region9
  $region8: #{mygcn_forward.2} parent=0 // pred_region
    _
  $region9: #{mygcn_forward.2} parent=0 // pred_fallthru
    _
  // Predicated region
  $region10: #{mygcn_forward.2} parent=0 // pred_check
    _
  $region11: #{mygcn_forward.2} parent=0 // pred_check_branch
    %14 = sbr.rel (0) target = $region13
  $region12: #{mygcn_forward.2} parent=0 // pred_region
    _
  $region13: #{mygcn_forward.2} parent=0 // pred_fallthru
    _
  // Predicated region
  $region14: #{mygcn_forward.2} parent=0 // pred_check
    _
  $region15: #{mygcn_forward.2} parent=0 // pred_check_branch
    %16 = sbr.rel (0) target = $region17
  $region16: #{mygcn_forward.2} parent=0 // pred_region
    _
  $region17: #{mygcn_forward.2} parent=0 // pred_fallthru
    _
  %p17 = scmp.eq.s32.totalorder 0, 0
  // Predicated region
  $region18: #{mygcn_forward.2} parent=0 // pred_check
    %p18 = pneg %p17
  $region19: #{mygcn_forward.2} parent=0 // pred_check_branch
    %20 = sbr.rel (%p18) target = $region21
  $region20: #{mygcn_forward.2} parent=0 // pred_region
    %21 = vst [vmem:[#allocation2] sm:$0xff] 0.0
    %22 = vst [vmem:[#allocation2 + $0x8] sm:$0xff] 0.0
    %23 = vst [vmem:[#allocation2 + $0x10] sm:$0xff] 0.0
    %24 = vst [vmem:[#allocation2 + $0x18] sm:$0xff] 0.0
    %25 = vst [vmem:[#allocation2 + $0x20] sm:$0xff] 0.0
    %26 = vst [vmem:[#allocation2 + $0x28] sm:$0xff] 0.0
    %27 = vst [vmem:[#allocation2 + $0x30] sm:$0xff] 0.0
    %28 = vst [vmem:[#allocation2 + $0x38] sm:$0xff] 0.0
    %29 = vst [vmem:[#allocation2 + $0x40] sm:$0xff] 0.0
    %30 = vst [vmem:[#allocation2 + $0x48] sm:$0xff] 0.0
    %31 = vst [vmem:[#allocation2 + $0x50] sm:$0xff] 0.0
    %32 = vst [vmem:[#allocation2 + $0x58] sm:$0xff] 0.0
    %33 = vst [vmem:[#allocation2 + $0x60] sm:$0xff] 0.0
    %34 = vst [vmem:[#allocation2 + $0x68] sm:$0xff] 0.0
    %35 = vst [vmem:[#allocation2 + $0x70] sm:$0xff] 0.0
    %36 = vst [vmem:[#allocation2 + $0x78] sm:$0xff] 0.0
  $region21: #{mygcn_forward.2} parent=0 // pred_fallthru
    _
  %s37 = smul.u32 0, 128
  %s38 = sshra.s32 %s37, 3
  %s39 = sand.u32 %s37, 7
  %s40 = smul.addr %s38, 4
  %s41 = scalar_lea.vmem %s1, %s40
  %v42 = vld [vmem:[%s41] sm:$0xf]
  %v43 = vld [vmem:[%s41 + $0x4] sm:$0xf]
  %v44 = vld [vmem:[%s41 + $0x8] sm:$0xf]
  %v45 = vld [vmem:[%s41 + $0xc] sm:$0xf]
  %v46 = vld [vmem:[%s41 + $0x10] sm:$0xf]
  %v47 = vld [vmem:[%s41 + $0x14] sm:$0xf]
  %v48 = vld [vmem:[%s41 + $0x18] sm:$0xf]
  %v49 = vld [vmem:[%s41 + $0x1c] sm:$0xf]
  %v50 = vld [vmem:[%s41 + $0x20] sm:$0xf]
  %v51 = vld [vmem:[%s41 + $0x24] sm:$0xf]
  %v52 = vld [vmem:[%s41 + $0x28] sm:$0xf]
  %v53 = vld [vmem:[%s41 + $0x2c] sm:$0xf]
  %v54 = vld [vmem:[%s41 + $0x30] sm:$0xf]
  %v55 = vld [vmem:[%s41 + $0x34] sm:$0xf]
  %v56 = vld [vmem:[%s41 + $0x38] sm:$0xf]
  %v57 = vld [vmem:[%s41 + $0x3c] sm:$0xf]
  %v58 = vld [vmem:[#allocation2] sm:$0xff]
  %v59 = vld [vmem:[#allocation2 + $0x8] sm:$0xff]
  %v60 = vld [vmem:[#allocation2 + $0x10] sm:$0xff]
  %v61 = vld [vmem:[#allocation2 + $0x18] sm:$0xff]
  %v62 = vld [vmem:[#allocation2 + $0x20] sm:$0xff]
  %v63 = vld [vmem:[#allocation2 + $0x28] sm:$0xff]
  %v64 = vld [vmem:[#allocation2 + $0x30] sm:$0xff]
  %v65 = vld [vmem:[#allocation2 + $0x38] sm:$0xff]
  %v66 = vld [vmem:[#allocation2 + $0x40] sm:$0xff]
  %v67 = vld [vmem:[#allocation2 + $0x48] sm:$0xff]
  %v68 = vld [vmem:[#allocation2 + $0x50] sm:$0xff]
  %v69 = vld [vmem:[#allocation2 + $0x58] sm:$0xff]
  %v70 = vld [vmem:[#allocation2 + $0x60] sm:$0xff]
  %v71 = vld [vmem:[#allocation2 + $0x68] sm:$0xff]
  %v72 = vld [vmem:[#allocation2 + $0x70] sm:$0xff]
  %v73 = vld [vmem:[#allocation2 + $0x78] sm:$0xff]
  %v74 = vld [vmem:[%s0] sm:$0xf]
  %v75 = vld [vmem:[%s0 + $0x4] sm:$0xf]
  %v76 = vld [vmem:[%s0 + $0x8] sm:$0xf]
  %v77 = vld [vmem:[%s0 + $0xc] sm:$0xf]
  %v78 = vld [vmem:[%s0 + $0x10] sm:$0xf]
  %v79 = vld [vmem:[%s0 + $0x14] sm:$0xf]
  %v80 = vld [vmem:[%s0 + $0x18] sm:$0xf]
  %v81 = vld [vmem:[%s0 + $0x1c] sm:$0xf]
  %v82 = vld [vmem:[%s0 + $0x20] sm:$0xf]
  %v83 = vld [vmem:[%s0 + $0x24] sm:$0xf]
  %v84 = vld [vmem:[%s0 + $0x28] sm:$0xf]
  %v85 = vld [vmem:[%s0 + $0x2c] sm:$0xf]
  %v86 = vld [vmem:[%s0 + $0x30] sm:$0xf]
  %v87 = vld [vmem:[%s0 + $0x34] sm:$0xf]
  %v88 = vld [vmem:[%s0 + $0x38] sm:$0xf]
  %v89 = vld [vmem:[%s0 + $0x3c] sm:$0xf]
  %v106 = vunpack.c.l.b16 %v74
  %v107 = vunpack.c.l.b16 %v75
  %v108 = vunpack.c.l.b16 %v76
  %v109 = vunpack.c.l.b16 %v77
  %v110 = vunpack.c.l.b16 %v78
  %v111 = vunpack.c.l.b16 %v79
  %v112 = vunpack.c.l.b16 %v80
  %v113 = vunpack.c.l.b16 %v81
  %v114 = vunpack.c.l.b16 %v82
  %v115 = vunpack.c.l.b16 %v83
  %v116 = vunpack.c.l.b16 %v84
  %v117 = vunpack.c.l.b16 %v85
  %v118 = vunpack.c.l.b16 %v86
  %v119 = vunpack.c.l.b16 %v87
  %v120 = vunpack.c.l.b16 %v88
  %v121 = vunpack.c.l.b16 %v89
  %v122 = vpack.c.b16 %v107, %v106
  %v123 = vpack.c.b16 %v109, %v108
  %v124 = vpack.c.b16 %v111, %v110
  %v125 = vpack.c.b16 %v113, %v112
  %v126 = vpack.c.b16 %v115, %v114
  %v127 = vpack.c.b16 %v117, %v116
  %v128 = vpack.c.b16 %v119, %v118
  %v129 = vpack.c.b16 %v121, %v120
  %v154 = vunpack.c.l.b16 %v42
  %v155 = vunpack.c.l.b16 %v43
  %v156 = vunpack.c.l.b16 %v44
  %v157 = vunpack.c.l.b16 %v45
  %v158 = vunpack.c.l.b16 %v46
  %v159 = vunpack.c.l.b16 %v47
  %v160 = vunpack.c.l.b16 %v48
  %v161 = vunpack.c.l.b16 %v49
  %v162 = vunpack.c.l.b16 %v50
  %v163 = vunpack.c.l.b16 %v51
  %v164 = vunpack.c.l.b16 %v52
  %v165 = vunpack.c.l.b16 %v53
  %v166 = vunpack.c.l.b16 %v54
  %v167 = vunpack.c.l.b16 %v55
  %v168 = vunpack.c.l.b16 %v56
  %v169 = vunpack.c.l.b16 %v57
  %v170 = vpack.c.b16 %v155, %v154
  %v171 = vpack.c.b16 %v157, %v156
  %v172 = vpack.c.b16 %v159, %v158
  %v173 = vpack.c.b16 %v161, %v160
  %v174 = vpack.c.b16 %v163, %v162
  %v175 = vpack.c.b16 %v165, %v164
  %v176 = vpack.c.b16 %v167, %v166
  %v177 = vpack.c.b16 %v169, %v168
  %186 = vmatpush.bf16.msra.mxu0 %v177
  %187 = vmatpush.bf16.msra.mxu0 %v176
  %188 = vmatpush.bf16.msra.mxu0 %v175
  %189 = vmatpush.bf16.msra.mxu0 %v174
  %190 = vmatpush.bf16.msra.mxu0 %v173
  %191 = vmatpush.bf16.msra.mxu0 %v172
  %192 = vmatpush.bf16.msra.mxu0 %v171
  %193 = vmatpush.bf16.msra.mxu0 %v170
  %194 = vmatmul.bf16.gmra.mxu0 %v122
  %v195 = vpop.f32.mrf.mxu0
  %v196 = vadd.f32 0.0, %v195
  %v197 = vpop.f32.mrf.mxu0
  %v198 = vadd.f32 0.0, %v197
  %199 = vmatmul.bf16.gmra.mxu0 %v123
  %v200 = vpop.f32.mrf.mxu0
  %v201 = vadd.f32 0.0, %v200
  %v202 = vpop.f32.mrf.mxu0
  %v203 = vadd.f32 0.0, %v202
  %204 = vmatmul.bf16.gmra.mxu0 %v124
  %v205 = vpop.f32.mrf.mxu0
  %v206 = vadd.f32 0.0, %v205
  %v207 = vpop.f32.mrf.mxu0
  %v208 = vadd.f32 0.0, %v207
  %209 = vmatmul.bf16.gmra.mxu0 %v125
  %v210 = vpop.f32.mrf.mxu0
  %v211 = vadd.f32 0.0, %v210
  %v212 = vpop.f32.mrf.mxu0
  %v213 = vadd.f32 0.0, %v212
  %214 = vmatmul.bf16.gmra.mxu0 %v126
  %v215 = vpop.f32.mrf.mxu0
  %v216 = vadd.f32 0.0, %v215
  %v217 = vpop.f32.mrf.mxu0
  %v218 = vadd.f32 0.0, %v217
  %219 = vmatmul.bf16.gmra.mxu0 %v127
  %v220 = vpop.f32.mrf.mxu0
  %v221 = vadd.f32 0.0, %v220
  %v222 = vpop.f32.mrf.mxu0
  %v223 = vadd.f32 0.0, %v222
  %224 = vmatmul.bf16.gmra.mxu0 %v128
  %v225 = vpop.f32.mrf.mxu0
  %v226 = vadd.f32 0.0, %v225
  %v227 = vpop.f32.mrf.mxu0
  %v228 = vadd.f32 0.0, %v227
  %229 = vmatmul.bf16.gmra.mxu0 %v129
  %v230 = vpop.f32.mrf.mxu0
  %v231 = vadd.f32 0.0, %v230
  %v232 = vpop.f32.mrf.mxu0
  %v233 = vadd.f32 0.0, %v232
  %234 = vdwg.mxu0
  %v235 = vadd.f32 %v58, %v196
  %v236 = vadd.f32 %v59, %v198
  %v237 = vadd.f32 %v60, %v201
  %v238 = vadd.f32 %v61, %v203
  %v239 = vadd.f32 %v62, %v206
  %v240 = vadd.f32 %v63, %v208
  %v241 = vadd.f32 %v64, %v211
  %v242 = vadd.f32 %v65, %v213
  %v243 = vadd.f32 %v66, %v216
  %v244 = vadd.f32 %v67, %v218
  %v245 = vadd.f32 %v68, %v221
  %v246 = vadd.f32 %v69, %v223
  %v247 = vadd.f32 %v70, %v226
  %v248 = vadd.f32 %v71, %v228
  %v249 = vadd.f32 %v72, %v231
  %v250 = vadd.f32 %v73, %v233
  %251 = vst [vmem:[#allocation2] sm:$0xff] %v235
  %252 = vst [vmem:[#allocation2 + $0x8] sm:$0xff] %v236
  %253 = vst [vmem:[#allocation2 + $0x10] sm:$0xff] %v237
  %254 = vst [vmem:[#allocation2 + $0x18] sm:$0xff] %v238
  %255 = vst [vmem:[#allocation2 + $0x20] sm:$0xff] %v239
  %256 = vst [vmem:[#allocation2 + $0x28] sm:$0xff] %v240
  %257 = vst [vmem:[#allocation2 + $0x30] sm:$0xff] %v241
  %258 = vst [vmem:[#allocation2 + $0x38] sm:$0xff] %v242
  %259 = vst [vmem:[#allocation2 + $0x40] sm:$0xff] %v243
  %260 = vst [vmem:[#allocation2 + $0x48] sm:$0xff] %v244
  %261 = vst [vmem:[#allocation2 + $0x50] sm:$0xff] %v245
  %262 = vst [vmem:[#allocation2 + $0x58] sm:$0xff] %v246
  %263 = vst [vmem:[#allocation2 + $0x60] sm:$0xff] %v247
  %264 = vst [vmem:[#allocation2 + $0x68] sm:$0xff] %v248
  %265 = vst [vmem:[#allocation2 + $0x70] sm:$0xff] %v249
  %266 = vst [vmem:[#allocation2 + $0x78] sm:$0xff] %v250
  // Predicated region
  $region22: #{mygcn_forward.2} parent=0 // pred_check
    %p267 = pneg %p17
  $region23: #{mygcn_forward.2} parent=0 // pred_check_branch
    %269 = sbr.rel (%p267) target = $region25
  $region24: #{mygcn_forward.2} parent=0 // pred_region
    %v270 = vld [vmem:[#allocation2] sm:$0xff]
    %v271 = vld [vmem:[#allocation2 + $0x8] sm:$0xff]
    %v272 = vld [vmem:[#allocation2 + $0x10] sm:$0xff]
    %v273 = vld [vmem:[#allocation2 + $0x18] sm:$0xff]
    %v274 = vld [vmem:[#allocation2 + $0x20] sm:$0xff]
    %v275 = vld [vmem:[#allocation2 + $0x28] sm:$0xff]
    %v276 = vld [vmem:[#allocation2 + $0x30] sm:$0xff]
    %v277 = vld [vmem:[#allocation2 + $0x38] sm:$0xff]
    %v278 = vld [vmem:[#allocation2 + $0x40] sm:$0xff]
    %v279 = vld [vmem:[#allocation2 + $0x48] sm:$0xff]
    %v280 = vld [vmem:[#allocation2 + $0x50] sm:$0xff]
    %v281 = vld [vmem:[#allocation2 + $0x58] sm:$0xff]
    %v282 = vld [vmem:[#allocation2 + $0x60] sm:$0xff]
    %v283 = vld [vmem:[#allocation2 + $0x68] sm:$0xff]
    %v284 = vld [vmem:[#allocation2 + $0x70] sm:$0xff]
    %v285 = vld [vmem:[#allocation2 + $0x78] sm:$0xff]
    %v286 = vpack.c.bf16 %v271, %v270
    %v287 = vpack.c.bf16 %v273, %v272
    %v288 = vpack.c.bf16 %v275, %v274
    %v289 = vpack.c.bf16 %v277, %v276
    %v290 = vpack.c.bf16 %v279, %v278
    %v291 = vpack.c.bf16 %v281, %v280
    %v292 = vpack.c.bf16 %v283, %v282
    %v293 = vpack.c.bf16 %v285, %v284
    %v294 = vld [vmem:[%s2] sm:$0xf]
    %v295 = vld [vmem:[%s2 + $0x4] sm:$0xf]
    %v296 = vld [vmem:[%s2 + $0x8] sm:$0xf]
    %v297 = vld [vmem:[%s2 + $0xc] sm:$0xf]
    %v298 = vld [vmem:[%s2 + $0x10] sm:$0xf]
    %v299 = vld [vmem:[%s2 + $0x14] sm:$0xf]
    %v300 = vld [vmem:[%s2 + $0x18] sm:$0xf]
    %v301 = vld [vmem:[%s2 + $0x1c] sm:$0xf]
    %v302 = vld [vmem:[%s2 + $0x20] sm:$0xf]
    %v303 = vld [vmem:[%s2 + $0x24] sm:$0xf]
    %v304 = vld [vmem:[%s2 + $0x28] sm:$0xf]
    %v305 = vld [vmem:[%s2 + $0x2c] sm:$0xf]
    %v306 = vld [vmem:[%s2 + $0x30] sm:$0xf]
    %v307 = vld [vmem:[%s2 + $0x34] sm:$0xf]
    %v308 = vld [vmem:[%s2 + $0x38] sm:$0xf]
    %v309 = vld [vmem:[%s2 + $0x3c] sm:$0xf]
    %v310 = vld [vmem:[%s3] sm:$0x1]
    %v312 = vperm.slane %v310, 0
    %v330 = vunpack.c.l.b16 %v294
    %v331 = vunpack.c.l.b16 %v295
    %v332 = vunpack.c.l.b16 %v296
    %v333 = vunpack.c.l.b16 %v297
    %v334 = vunpack.c.l.b16 %v298
    %v335 = vunpack.c.l.b16 %v299
    %v336 = vunpack.c.l.b16 %v300
    %v337 = vunpack.c.l.b16 %v301
    %v338 = vunpack.c.l.b16 %v302
    %v339 = vunpack.c.l.b16 %v303
    %v340 = vunpack.c.l.b16 %v304
    %v341 = vunpack.c.l.b16 %v305
    %v342 = vunpack.c.l.b16 %v306
    %v343 = vunpack.c.l.b16 %v307
    %v344 = vunpack.c.l.b16 %v308
    %v345 = vunpack.c.l.b16 %v309
    %v346 = vpack.c.b16 %v331, %v330
    %v347 = vpack.c.b16 %v333, %v332
    %v348 = vpack.c.b16 %v335, %v334
    %v349 = vpack.c.b16 %v337, %v336
    %v350 = vpack.c.b16 %v339, %v338
    %v351 = vpack.c.b16 %v341, %v340
    %v352 = vpack.c.b16 %v343, %v342
    %v353 = vpack.c.b16 %v345, %v344
    %362 = vmatpush.bf16.msra.mxu0 %v353
    %363 = vmatpush.bf16.msra.mxu0 %v352
    %364 = vmatpush.bf16.msra.mxu0 %v351
    %365 = vmatpush.bf16.msra.mxu0 %v350
    %366 = vmatpush.bf16.msra.mxu0 %v349
    %367 = vmatpush.bf16.msra.mxu0 %v348
    %368 = vmatpush.bf16.msra.mxu0 %v347
    %369 = vmatpush.bf16.msra.mxu0 %v346
    %370 = vmatmul.bf16.gmra.mxu0 %v286
    %v371 = vpop.f32.mrf.mxu0
    %v372 = vadd.f32 %v312, %v371
    %v373 = vpop.f32.mrf.mxu0
    %v374 = vadd.f32 %v312, %v373
    %375 = vmatmul.bf16.gmra.mxu0 %v287
    %v376 = vpop.f32.mrf.mxu0
    %v377 = vadd.f32 %v312, %v376
    %v378 = vpop.f32.mrf.mxu0
    %v379 = vadd.f32 %v312, %v378
    %380 = vmatmul.bf16.gmra.mxu0 %v288
    %v381 = vpop.f32.mrf.mxu0
    %v382 = vadd.f32 %v312, %v381
    %v383 = vpop.f32.mrf.mxu0
    %v384 = vadd.f32 %v312, %v383
    %385 = vmatmul.bf16.gmra.mxu0 %v289
    %v386 = vpop.f32.mrf.mxu0
    %v387 = vadd.f32 %v312, %v386
    %v388 = vpop.f32.mrf.mxu0
    %v389 = vadd.f32 %v312, %v388
    %390 = vmatmul.bf16.gmra.mxu0 %v290
    %v391 = vpop.f32.mrf.mxu0
    %v392 = vadd.f32 %v312, %v391
    %v393 = vpop.f32.mrf.mxu0
    %v394 = vadd.f32 %v312, %v393
    %395 = vmatmul.bf16.gmra.mxu0 %v291
    %v396 = vpop.f32.mrf.mxu0
    %v397 = vadd.f32 %v312, %v396
    %v398 = vpop.f32.mrf.mxu0
    %v399 = vadd.f32 %v312, %v398
    %400 = vmatmul.bf16.gmra.mxu0 %v292
    %v401 = vpop.f32.mrf.mxu0
    %v402 = vadd.f32 %v312, %v401
    %v403 = vpop.f32.mrf.mxu0
    %v404 = vadd.f32 %v312, %v403
    %405 = vmatmul.bf16.gmra.mxu0 %v293
    %v406 = vpop.f32.mrf.mxu0
    %v407 = vadd.f32 %v312, %v406
    %v408 = vpop.f32.mrf.mxu0
    %v409 = vadd.f32 %v312, %v408
    %410 = vdwg.mxu0
    %v411 = vmax.f32 %v372, 0.0
    %v412 = vmax.f32 %v374, 0.0
    %v413 = vmax.f32 %v377, 0.0
    %v414 = vmax.f32 %v379, 0.0
    %v415 = vmax.f32 %v382, 0.0
    %v416 = vmax.f32 %v384, 0.0
    %v417 = vmax.f32 %v387, 0.0
    %v418 = vmax.f32 %v389, 0.0
    %v419 = vmax.f32 %v392, 0.0
    %v420 = vmax.f32 %v394, 0.0
    %v421 = vmax.f32 %v397, 0.0
    %v422 = vmax.f32 %v399, 0.0
    %v423 = vmax.f32 %v402, 0.0
    %v424 = vmax.f32 %v404, 0.0
    %v425 = vmax.f32 %v407, 0.0
    %v426 = vmax.f32 %v409, 0.0
    %v427 = vpack.c.bf16 %v411, %v411
    %v428 = vpack.c.bf16 %v412, %v412
    %v429 = vpack.c.bf16 %v413, %v413
    %v430 = vpack.c.bf16 %v414, %v414
    %v431 = vpack.c.bf16 %v415, %v415
    %v432 = vpack.c.bf16 %v416, %v416
    %v433 = vpack.c.bf16 %v417, %v417
    %v434 = vpack.c.bf16 %v418, %v418
    %v435 = vpack.c.bf16 %v419, %v419
    %v436 = vpack.c.bf16 %v420, %v420
    %v437 = vpack.c.bf16 %v421, %v421
    %v438 = vpack.c.bf16 %v422, %v422
    %v439 = vpack.c.bf16 %v423, %v423
    %v440 = vpack.c.bf16 %v424, %v424
    %v441 = vpack.c.bf16 %v425, %v425
    %v442 = vpack.c.bf16 %v426, %v426
    %443 = vst [vmem:[%s4] sm:$0xf] %v427
    %444 = vst [vmem:[%s4 + $0x4] sm:$0xf] %v428
    %445 = vst [vmem:[%s4 + $0x8] sm:$0xf] %v429
    %446 = vst [vmem:[%s4 + $0xc] sm:$0xf] %v430
    %447 = vst [vmem:[%s4 + $0x10] sm:$0xf] %v431
    %448 = vst [vmem:[%s4 + $0x14] sm:$0xf] %v432
    %449 = vst [vmem:[%s4 + $0x18] sm:$0xf] %v433
    %450 = vst [vmem:[%s4 + $0x1c] sm:$0xf] %v434
    %451 = vst [vmem:[%s4 + $0x20] sm:$0xf] %v435
    %452 = vst [vmem:[%s4 + $0x24] sm:$0xf] %v436
    %453 = vst [vmem:[%s4 + $0x28] sm:$0xf] %v437
    %454 = vst [vmem:[%s4 + $0x2c] sm:$0xf] %v438
    %455 = vst [vmem:[%s4 + $0x30] sm:$0xf] %v439
    %456 = vst [vmem:[%s4 + $0x34] sm:$0xf] %v440
    %457 = vst [vmem:[%s4 + $0x38] sm:$0xf] %v441
    %458 = vst [vmem:[%s4 + $0x3c] sm:$0xf] %v442
  $region25: #{mygcn_forward.2} parent=0 // pred_fallthru
    _
  // Predicated region
  $region26: #{mygcn_forward.2} parent=0 // pred_check
    _
  $region27: #{mygcn_forward.2} parent=0 // pred_check_branch
    %460 = sbr.rel (0) target = $region29
  $region28: #{mygcn_forward.2} parent=0 // pred_region
    _
  $region29: #{mygcn_forward.2} parent=0 // pred_fallthru
    _
  // Predicated region
  $region30: #{mygcn_forward.2} parent=0 // pred_check
    _
  $region31: #{mygcn_forward.2} parent=0 // pred_check_branch
    %462 = sbr.rel (0) target = $region33
  $region32: #{mygcn_forward.2} parent=0 // pred_region
    _
  $region33: #{mygcn_forward.2} parent=0 // pred_fallthru
    _

// kernel: mygcn_forward.3
$region0: #{mygcn_forward.3}
  #allocation0 [shape = 'u32[]', space=smem, size = 0x4, offset = 0x4, fixed_abs, tag = 'smem constant byte address 0x4 - core index']
  #allocation1 [shape = 'u32[72,128]{1,0:T(1,128)}', space=vmem, size = 0x9000, scoped, tag = 'internal scratch']
  #allocation2 [shape = 'f32[128,128]{1,0:T(8,128)}', space=vmem, size = 0x10000, scoped, tag = 'scratch operand']
  #allocation3 [shape = 'f32[8,128]{1,0:T(8,128)}', space=vmem, size = 0x1000, scoped, tag = 'scratch operand']
  %s0 = inlined_call_operand.vmem [shape: bf16[128,128], index: 0, kind: input, shape index: {}]
  %s1 = inlined_call_operand.vmem [shape: bf16[128,128], index: 1, kind: input, shape index: {}]
  %s2 = inlined_call_operand.vmem [shape: bf16[128,128], index: 2, kind: input, shape index: {}]
  %s3 = inlined_call_operand.vmem [shape: f32[1,128], index: 3, kind: input, shape index: {}]
  %s4 = inlined_call_operand.vmem [shape: bf16[8,128], index: 4, kind: input, shape index: {}]
  %s5 = inlined_call_operand.vmem [shape: bf16[128,128], index: 5, kind: input, shape index: {}]
  %s6 = inlined_call_operand.vmem [shape: f32[1,128], index: 6, kind: input, shape index: {}]
  %s7 = inlined_call_operand.vmem [shape: f32[8,128], index: 7, kind: output, shape index: {}]
  %s8 = sld [smem:[#allocation0]]
  $region54: #{mygcn_forward.3} parent=0
    _
  %s10 = ssub.s32 1, %s8
  %s11 = scalar_select 0, %s10, %s8
  // Predicated region
  $region2: #{mygcn_forward.3} parent=0 // pred_check
    _
  $region3: #{mygcn_forward.3} parent=0 // pred_check_branch
    %13 = sbr.rel (0) target = $region5
  $region4: #{mygcn_forward.3} parent=0 // pred_region
    _
  $region5: #{mygcn_forward.3} parent=0 // pred_fallthru
    _
  // Predicated region
  $region6: #{mygcn_forward.3} parent=0 // pred_check
    _
  $region7: #{mygcn_forward.3} parent=0 // pred_check_branch
    %15 = sbr.rel (0) target = $region9
  $region8: #{mygcn_forward.3} parent=0 // pred_region
    _
  $region9: #{mygcn_forward.3} parent=0 // pred_fallthru
    _
  // Predicated region
  $region10: #{mygcn_forward.3} parent=0 // pred_check
    _
  $region11: #{mygcn_forward.3} parent=0 // pred_check_branch
    %17 = sbr.rel (0) target = $region13
  $region12: #{mygcn_forward.3} parent=0 // pred_region
    _
  $region13: #{mygcn_forward.3} parent=0 // pred_fallthru
    _
  // Predicated region
  $region14: #{mygcn_forward.3} parent=0 // pred_check
    _
  $region15: #{mygcn_forward.3} parent=0 // pred_check_branch
    %19 = sbr.rel (0) target = $region17
  $region16: #{mygcn_forward.3} parent=0 // pred_region
    _
  $region17: #{mygcn_forward.3} parent=0 // pred_fallthru
    _
  // Predicated region
  $region18: #{mygcn_forward.3} parent=0 // pred_check
    _
  $region19: #{mygcn_forward.3} parent=0 // pred_check_branch
    %21 = sbr.rel (0) target = $region21
  $region20: #{mygcn_forward.3} parent=0 // pred_region
    _
  $region21: #{mygcn_forward.3} parent=0 // pred_fallthru
    _
  // Predicated region
  $region22: #{mygcn_forward.3} parent=0 // pred_check
    _
  $region23: #{mygcn_forward.3} parent=0 // pred_check_branch
    %23 = sbr.rel (0) target = $region25
  $region24: #{mygcn_forward.3} parent=0 // pred_region
    _
  $region25: #{mygcn_forward.3} parent=0 // pred_fallthru
    _
  // Predicated region
  $region26: #{mygcn_forward.3} parent=0 // pred_check
    _
  $region27: #{mygcn_forward.3} parent=0 // pred_check_branch
    %25 = sbr.rel (0) target = $region29
  $region28: #{mygcn_forward.3} parent=0 // pred_region
    _
  $region29: #{mygcn_forward.3} parent=0 // pred_fallthru
    _
  %p26 = scmp.eq.s32.totalorder 0, 0
  %p27 = scmp.eq.s32.totalorder 0, 0
  %p28 = pnand %p27, %p26
  %p29 = pneg %p28
  // Predicated region
  $region30: #{mygcn_forward.3} parent=0 // pred_check
    _
  $region31: #{mygcn_forward.3} parent=0 // pred_check_branch
    %31 = sbr.rel (%p28) target = $region33
  $region32: #{mygcn_forward.3} parent=0 // pred_region
    %32 = vst [vmem:[#allocation3] sm:$0xff] 0.0
  $region33: #{mygcn_forward.3} parent=0 // pred_fallthru
    _
  // Predicated region
  $region34: #{mygcn_forward.3} parent=0 // pred_check
    %p33 = pneg %p26
  $region35: #{mygcn_forward.3} parent=0 // pred_check_branch
    %35 = sbr.rel (%p33) target = $region37
  $region36: #{mygcn_forward.3} parent=0 // pred_region
    %36 = vst [vmem:[#allocation2] sm:$0xff] 0.0
    %37 = vst [vmem:[#allocation2 + $0x8] sm:$0xff] 0.0
    %38 = vst [vmem:[#allocation2 + $0x10] sm:$0xff] 0.0
    %39 = vst [vmem:[#allocation2 + $0x18] sm:$0xff] 0.0
    %40 = vst [vmem:[#allocation2 + $0x20] sm:$0xff] 0.0
    %41 = vst [vmem:[#allocation2 + $0x28] sm:$0xff] 0.0
    %42 = vst [vmem:[#allocation2 + $0x30] sm:$0xff] 0.0
    %43 = vst [vmem:[#allocation2 + $0x38] sm:$0xff] 0.0
    %44 = vst [vmem:[#allocation2 + $0x40] sm:$0xff] 0.0
    %45 = vst [vmem:[#allocation2 + $0x48] sm:$0xff] 0.0
    %46 = vst [vmem:[#allocation2 + $0x50] sm:$0xff] 0.0
    %47 = vst [vmem:[#allocation2 + $0x58] sm:$0xff] 0.0
    %48 = vst [vmem:[#allocation2 + $0x60] sm:$0xff] 0.0
    %49 = vst [vmem:[#allocation2 + $0x68] sm:$0xff] 0.0
    %50 = vst [vmem:[#allocation2 + $0x70] sm:$0xff] 0.0
    %51 = vst [vmem:[#allocation2 + $0x78] sm:$0xff] 0.0
  $region37: #{mygcn_forward.3} parent=0 // pred_fallthru
    _
  %s52 = smul.u32 0, 128
  %s53 = sshra.s32 %s52, 3
  %s54 = sand.u32 %s52, 7
  %s55 = smul.addr %s53, 4
  %s56 = scalar_lea.vmem %s1, %s55
  %v57 = vld [vmem:[%s56] sm:$0xf]
  %v58 = vld [vmem:[%s56 + $0x4] sm:$0xf]
  %v59 = vld [vmem:[%s56 + $0x8] sm:$0xf]
  %v60 = vld [vmem:[%s56 + $0xc] sm:$0xf]
  %v61 = vld [vmem:[%s56 + $0x10] sm:$0xf]
  %v62 = vld [vmem:[%s56 + $0x14] sm:$0xf]
  %v63 = vld [vmem:[%s56 + $0x18] sm:$0xf]
  %v64 = vld [vmem:[%s56 + $0x1c] sm:$0xf]
  %v65 = vld [vmem:[%s56 + $0x20] sm:$0xf]
  %v66 = vld [vmem:[%s56 + $0x24] sm:$0xf]
  %v67 = vld [vmem:[%s56 + $0x28] sm:$0xf]
  %v68 = vld [vmem:[%s56 + $0x2c] sm:$0xf]
  %v69 = vld [vmem:[%s56 + $0x30] sm:$0xf]
  %v70 = vld [vmem:[%s56 + $0x34] sm:$0xf]
  %v71 = vld [vmem:[%s56 + $0x38] sm:$0xf]
  %v72 = vld [vmem:[%s56 + $0x3c] sm:$0xf]
  %v73 = vld [vmem:[#allocation2] sm:$0xff]
  %v74 = vld [vmem:[#allocation2 + $0x8] sm:$0xff]
  %v75 = vld [vmem:[#allocation2 + $0x10] sm:$0xff]
  %v76 = vld [vmem:[#allocation2 + $0x18] sm:$0xff]
  %v77 = vld [vmem:[#allocation2 + $0x20] sm:$0xff]
  %v78 = vld [vmem:[#allocation2 + $0x28] sm:$0xff]
  %v79 = vld [vmem:[#allocation2 + $0x30] sm:$0xff]
  %v80 = vld [vmem:[#allocation2 + $0x38] sm:$0xff]
  %v81 = vld [vmem:[#allocation2 + $0x40] sm:$0xff]
  %v82 = vld [vmem:[#allocation2 + $0x48] sm:$0xff]
  %v83 = vld [vmem:[#allocation2 + $0x50] sm:$0xff]
  %v84 = vld [vmem:[#allocation2 + $0x58] sm:$0xff]
  %v85 = vld [vmem:[#allocation2 + $0x60] sm:$0xff]
  %v86 = vld [vmem:[#allocation2 + $0x68] sm:$0xff]
  %v87 = vld [vmem:[#allocation2 + $0x70] sm:$0xff]
  %v88 = vld [vmem:[#allocation2 + $0x78] sm:$0xff]
  %v89 = vld [vmem:[%s0] sm:$0xf]
  %v90 = vld [vmem:[%s0 + $0x4] sm:$0xf]
  %v91 = vld [vmem:[%s0 + $0x8] sm:$0xf]
  %v92 = vld [vmem:[%s0 + $0xc] sm:$0xf]
  %v93 = vld [vmem:[%s0 + $0x10] sm:$0xf]
  %v94 = vld [vmem:[%s0 + $0x14] sm:$0xf]
  %v95 = vld [vmem:[%s0 + $0x18] sm:$0xf]
  %v96 = vld [vmem:[%s0 + $0x1c] sm:$0xf]
  %v97 = vld [vmem:[%s0 + $0x20] sm:$0xf]
  %v98 = vld [vmem:[%s0 + $0x24] sm:$0xf]
  %v99 = vld [vmem:[%s0 + $0x28] sm:$0xf]
  %v100 = vld [vmem:[%s0 + $0x2c] sm:$0xf]
  %v101 = vld [vmem:[%s0 + $0x30] sm:$0xf]
  %v102 = vld [vmem:[%s0 + $0x34] sm:$0xf]
  %v103 = vld [vmem:[%s0 + $0x38] sm:$0xf]
  %v104 = vld [vmem:[%s0 + $0x3c] sm:$0xf]
  %v121 = vunpack.c.l.b16 %v89
  %v122 = vunpack.c.l.b16 %v90
  %v123 = vunpack.c.l.b16 %v91
  %v124 = vunpack.c.l.b16 %v92
  %v125 = vunpack.c.l.b16 %v93
  %v126 = vunpack.c.l.b16 %v94
  %v127 = vunpack.c.l.b16 %v95
  %v128 = vunpack.c.l.b16 %v96
  %v129 = vunpack.c.l.b16 %v97
  %v130 = vunpack.c.l.b16 %v98
  %v131 = vunpack.c.l.b16 %v99
  %v132 = vunpack.c.l.b16 %v100
  %v133 = vunpack.c.l.b16 %v101
  %v134 = vunpack.c.l.b16 %v102
  %v135 = vunpack.c.l.b16 %v103
  %v136 = vunpack.c.l.b16 %v104
  %v137 = vpack.c.b16 %v122, %v121
  %v138 = vpack.c.b16 %v124, %v123
  %v139 = vpack.c.b16 %v126, %v125
  %v140 = vpack.c.b16 %v128, %v127
  %v141 = vpack.c.b16 %v130, %v129
  %v142 = vpack.c.b16 %v132, %v131
  %v143 = vpack.c.b16 %v134, %v133
  %v144 = vpack.c.b16 %v136, %v135
  %v169 = vunpack.c.l.b16 %v57
  %v170 = vunpack.c.l.b16 %v58
  %v171 = vunpack.c.l.b16 %v59
  %v172 = vunpack.c.l.b16 %v60
  %v173 = vunpack.c.l.b16 %v61
  %v174 = vunpack.c.l.b16 %v62
  %v175 = vunpack.c.l.b16 %v63
  %v176 = vunpack.c.l.b16 %v64
  %v177 = vunpack.c.l.b16 %v65
  %v178 = vunpack.c.l.b16 %v66
  %v179 = vunpack.c.l.b16 %v67
  %v180 = vunpack.c.l.b16 %v68
  %v181 = vunpack.c.l.b16 %v69
  %v182 = vunpack.c.l.b16 %v70
  %v183 = vunpack.c.l.b16 %v71
  %v184 = vunpack.c.l.b16 %v72
  %v185 = vpack.c.b16 %v170, %v169
  %v186 = vpack.c.b16 %v172, %v171
  %v187 = vpack.c.b16 %v174, %v173
  %v188 = vpack.c.b16 %v176, %v175
  %v189 = vpack.c.b16 %v178, %v177
  %v190 = vpack.c.b16 %v180, %v179
  %v191 = vpack.c.b16 %v182, %v181
  %v192 = vpack.c.b16 %v184, %v183
  %201 = vmatpush.bf16.msra.mxu0 %v192
  %202 = vmatpush.bf16.msra.mxu0 %v191
  %203 = vmatpush.bf16.msra.mxu0 %v190
  %204 = vmatpush.bf16.msra.mxu0 %v189
  %205 = vmatpush.bf16.msra.mxu0 %v188
  %206 = vmatpush.bf16.msra.mxu0 %v187
  %207 = vmatpush.bf16.msra.mxu0 %v186
  %208 = vmatpush.bf16.msra.mxu0 %v185
  %209 = vmatmul.bf16.gmra.mxu0 %v137
  %v210 = vpop.f32.mrf.mxu0
  %v211 = vadd.f32 0.0, %v210
  %v212 = vpop.f32.mrf.mxu0
  %v213 = vadd.f32 0.0, %v212
  %214 = vmatmul.bf16.gmra.mxu0 %v138
  %v215 = vpop.f32.mrf.mxu0
  %v216 = vadd.f32 0.0, %v215
  %v217 = vpop.f32.mrf.mxu0
  %v218 = vadd.f32 0.0, %v217
  %219 = vmatmul.bf16.gmra.mxu0 %v139
  %v220 = vpop.f32.mrf.mxu0
  %v221 = vadd.f32 0.0, %v220
  %v222 = vpop.f32.mrf.mxu0
  %v223 = vadd.f32 0.0, %v222
  %224 = vmatmul.bf16.gmra.mxu0 %v140
  %v225 = vpop.f32.mrf.mxu0
  %v226 = vadd.f32 0.0, %v225
  %v227 = vpop.f32.mrf.mxu0
  %v228 = vadd.f32 0.0, %v227
  %229 = vmatmul.bf16.gmra.mxu0 %v141
  %v230 = vpop.f32.mrf.mxu0
  %v231 = vadd.f32 0.0, %v230
  %v232 = vpop.f32.mrf.mxu0
  %v233 = vadd.f32 0.0, %v232
  %234 = vmatmul.bf16.gmra.mxu0 %v142
  %v235 = vpop.f32.mrf.mxu0
  %v236 = vadd.f32 0.0, %v235
  %v237 = vpop.f32.mrf.mxu0
  %v238 = vadd.f32 0.0, %v237
  %239 = vmatmul.bf16.gmra.mxu0 %v143
  %v240 = vpop.f32.mrf.mxu0
  %v241 = vadd.f32 0.0, %v240
  %v242 = vpop.f32.mrf.mxu0
  %v243 = vadd.f32 0.0, %v242
  %244 = vmatmul.bf16.gmra.mxu0 %v144
  %v245 = vpop.f32.mrf.mxu0
  %v246 = vadd.f32 0.0, %v245
  %v247 = vpop.f32.mrf.mxu0
  %v248 = vadd.f32 0.0, %v247
  %249 = vdwg.mxu0
  %v250 = vadd.f32 %v73, %v211
  %v251 = vadd.f32 %v74, %v213
  %v252 = vadd.f32 %v75, %v216
  %v253 = vadd.f32 %v76, %v218
  %v254 = vadd.f32 %v77, %v221
  %v255 = vadd.f32 %v78, %v223
  %v256 = vadd.f32 %v79, %v226
  %v257 = vadd.f32 %v80, %v228
  %v258 = vadd.f32 %v81, %v231
  %v259 = vadd.f32 %v82, %v233
  %v260 = vadd.f32 %v83, %v236
  %v261 = vadd.f32 %v84, %v238
  %v262 = vadd.f32 %v85, %v241
  %v263 = vadd.f32 %v86, %v243
  %v264 = vadd.f32 %v87, %v246
  %v265 = vadd.f32 %v88, %v248
  %266 = vst [vmem:[#allocation2] sm:$0xff] %v250
  %267 = vst [vmem:[#allocation2 + $0x8] sm:$0xff] %v251
  %268 = vst [vmem:[#allocation2 + $0x10] sm:$0xff] %v252
  %269 = vst [vmem:[#allocation2 + $0x18] sm:$0xff] %v253
  %270 = vst [vmem:[#allocation2 + $0x20] sm:$0xff] %v254
  %271 = vst [vmem:[#allocation2 + $0x28] sm:$0xff] %v255
  %272 = vst [vmem:[#allocation2 + $0x30] sm:$0xff] %v256
  %273 = vst [vmem:[#allocation2 + $0x38] sm:$0xff] %v257
  %274 = vst [vmem:[#allocation2 + $0x40] sm:$0xff] %v258
  %275 = vst [vmem:[#allocation2 + $0x48] sm:$0xff] %v259
  %276 = vst [vmem:[#allocation2 + $0x50] sm:$0xff] %v260
  %277 = vst [vmem:[#allocation2 + $0x58] sm:$0xff] %v261
  %278 = vst [vmem:[#allocation2 + $0x60] sm:$0xff] %v262
  %279 = vst [vmem:[#allocation2 + $0x68] sm:$0xff] %v263
  %280 = vst [vmem:[#allocation2 + $0x70] sm:$0xff] %v264
  %281 = vst [vmem:[#allocation2 + $0x78] sm:$0xff] %v265
  // Predicated region
  $region38: #{mygcn_forward.3} parent=0 // pred_check
    %p282 = pneg %p26
  $region39: #{mygcn_forward.3} parent=0 // pred_check_branch
    %284 = sbr.rel (%p282) target = $region41
  $region40: #{mygcn_forward.3} parent=0 // pred_region
    %v285 = vld [vmem:[#allocation2] sm:$0xff]
    %v286 = vld [vmem:[#allocation2 + $0x8] sm:$0xff]
    %v287 = vld [vmem:[#allocation2 + $0x10] sm:$0xff]
    %v288 = vld [vmem:[#allocation2 + $0x18] sm:$0xff]
    %v289 = vld [vmem:[#allocation2 + $0x20] sm:$0xff]
    %v290 = vld [vmem:[#allocation2 + $0x28] sm:$0xff]
    %v291 = vld [vmem:[#allocation2 + $0x30] sm:$0xff]
    %v292 = vld [vmem:[#allocation2 + $0x38] sm:$0xff]
    %v293 = vld [vmem:[#allocation2 + $0x40] sm:$0xff]
    %v294 = vld [vmem:[#allocation2 + $0x48] sm:$0xff]
    %v295 = vld [vmem:[#allocation2 + $0x50] sm:$0xff]
    %v296 = vld [vmem:[#allocation2 + $0x58] sm:$0xff]
    %v297 = vld [vmem:[#allocation2 + $0x60] sm:$0xff]
    %v298 = vld [vmem:[#allocation2 + $0x68] sm:$0xff]
    %v299 = vld [vmem:[#allocation2 + $0x70] sm:$0xff]
    %v300 = vld [vmem:[#allocation2 + $0x78] sm:$0xff]
    %v301 = vpack.c.bf16 %v286, %v285
    %v302 = vpack.c.bf16 %v288, %v287
    %v303 = vpack.c.bf16 %v290, %v289
    %v304 = vpack.c.bf16 %v292, %v291
    %v305 = vpack.c.bf16 %v294, %v293
    %v306 = vpack.c.bf16 %v296, %v295
    %v307 = vpack.c.bf16 %v298, %v297
    %v308 = vpack.c.bf16 %v300, %v299
    %v309 = vld [vmem:[%s2] sm:$0xf]
    %v310 = vld [vmem:[%s2 + $0x4] sm:$0xf]
    %v311 = vld [vmem:[%s2 + $0x8] sm:$0xf]
    %v312 = vld [vmem:[%s2 + $0xc] sm:$0xf]
    %v313 = vld [vmem:[%s2 + $0x10] sm:$0xf]
    %v314 = vld [vmem:[%s2 + $0x14] sm:$0xf]
    %v315 = vld [vmem:[%s2 + $0x18] sm:$0xf]
    %v316 = vld [vmem:[%s2 + $0x1c] sm:$0xf]
    %v317 = vld [vmem:[%s2 + $0x20] sm:$0xf]
    %v318 = vld [vmem:[%s2 + $0x24] sm:$0xf]
    %v319 = vld [vmem:[%s2 + $0x28] sm:$0xf]
    %v320 = vld [vmem:[%s2 + $0x2c] sm:$0xf]
    %v321 = vld [vmem:[%s2 + $0x30] sm:$0xf]
    %v322 = vld [vmem:[%s2 + $0x34] sm:$0xf]
    %v323 = vld [vmem:[%s2 + $0x38] sm:$0xf]
    %v324 = vld [vmem:[%s2 + $0x3c] sm:$0xf]
    %v325 = vld [vmem:[%s3] sm:$0x1]
    %v327 = vperm.slane %v325, 0
    %v345 = vunpack.c.l.b16 %v309
    %v346 = vunpack.c.l.b16 %v310
    %v347 = vunpack.c.l.b16 %v311
    %v348 = vunpack.c.l.b16 %v312
    %v349 = vunpack.c.l.b16 %v313
    %v350 = vunpack.c.l.b16 %v314
    %v351 = vunpack.c.l.b16 %v315
    %v352 = vunpack.c.l.b16 %v316
    %v353 = vunpack.c.l.b16 %v317
    %v354 = vunpack.c.l.b16 %v318
    %v355 = vunpack.c.l.b16 %v319
    %v356 = vunpack.c.l.b16 %v320
    %v357 = vunpack.c.l.b16 %v321
    %v358 = vunpack.c.l.b16 %v322
    %v359 = vunpack.c.l.b16 %v323
    %v360 = vunpack.c.l.b16 %v324
    %v361 = vpack.c.b16 %v346, %v345
    %v362 = vpack.c.b16 %v348, %v347
    %v363 = vpack.c.b16 %v350, %v349
    %v364 = vpack.c.b16 %v352, %v351
    %v365 = vpack.c.b16 %v354, %v353
    %v366 = vpack.c.b16 %v356, %v355
    %v367 = vpack.c.b16 %v358, %v357
    %v368 = vpack.c.b16 %v360, %v359
    %377 = vmatpush.bf16.msra.mxu0 %v368
    %378 = vmatpush.bf16.msra.mxu0 %v367
    %379 = vmatpush.bf16.msra.mxu0 %v366
    %380 = vmatpush.bf16.msra.mxu0 %v365
    %381 = vmatpush.bf16.msra.mxu0 %v364
    %382 = vmatpush.bf16.msra.mxu0 %v363
    %383 = vmatpush.bf16.msra.mxu0 %v362
    %384 = vmatpush.bf16.msra.mxu0 %v361
    %385 = vmatmul.bf16.gmra.mxu0 %v301
    %v386 = vpop.f32.mrf.mxu0
    %v387 = vadd.f32 %v327, %v386
    %v388 = vpop.f32.mrf.mxu0
    %v389 = vadd.f32 %v327, %v388
    %390 = vmatmul.bf16.gmra.mxu0 %v302
    %v391 = vpop.f32.mrf.mxu0
    %v392 = vadd.f32 %v327, %v391
    %v393 = vpop.f32.mrf.mxu0
    %v394 = vadd.f32 %v327, %v393
    %395 = vmatmul.bf16.gmra.mxu0 %v303
    %v396 = vpop.f32.mrf.mxu0
    %v397 = vadd.f32 %v327, %v396
    %v398 = vpop.f32.mrf.mxu0
    %v399 = vadd.f32 %v327, %v398
    %400 = vmatmul.bf16.gmra.mxu0 %v304
    %v401 = vpop.f32.mrf.mxu0
    %v402 = vadd.f32 %v327, %v401
    %v403 = vpop.f32.mrf.mxu0
    %v404 = vadd.f32 %v327, %v403
    %405 = vmatmul.bf16.gmra.mxu0 %v305
    %v406 = vpop.f32.mrf.mxu0
    %v407 = vadd.f32 %v327, %v406
    %v408 = vpop.f32.mrf.mxu0
    %v409 = vadd.f32 %v327, %v408
    %410 = vmatmul.bf16.gmra.mxu0 %v306
    %v411 = vpop.f32.mrf.mxu0
    %v412 = vadd.f32 %v327, %v411
    %v413 = vpop.f32.mrf.mxu0
    %v414 = vadd.f32 %v327, %v413
    %415 = vmatmul.bf16.gmra.mxu0 %v307
    %v416 = vpop.f32.mrf.mxu0
    %v417 = vadd.f32 %v327, %v416
    %v418 = vpop.f32.mrf.mxu0
    %v419 = vadd.f32 %v327, %v418
    %420 = vmatmul.bf16.gmra.mxu0 %v308
    %v421 = vpop.f32.mrf.mxu0
    %v422 = vadd.f32 %v327, %v421
    %v423 = vpop.f32.mrf.mxu0
    %v424 = vadd.f32 %v327, %v423
    %425 = vdwg.mxu0
    %v426 = vmax.f32 %v387, 0.0
    %v427 = vmax.f32 %v389, 0.0
    %v428 = vmax.f32 %v392, 0.0
    %v429 = vmax.f32 %v394, 0.0
    %v430 = vmax.f32 %v397, 0.0
    %v431 = vmax.f32 %v399, 0.0
    %v432 = vmax.f32 %v402, 0.0
    %v433 = vmax.f32 %v404, 0.0
    %v434 = vmax.f32 %v407, 0.0
    %v435 = vmax.f32 %v409, 0.0
    %v436 = vmax.f32 %v412, 0.0
    %v437 = vmax.f32 %v414, 0.0
    %v438 = vmax.f32 %v417, 0.0
    %v439 = vmax.f32 %v419, 0.0
    %v440 = vmax.f32 %v422, 0.0
    %v441 = vmax.f32 %v424, 0.0
    %v442 = vld [vmem:[#allocation3] sm:$0xff]
    %v443 = vld [vmem:[%s4] sm:$0xf]
    %v444 = vpack.c.bf16 %v427, %v426
    %v445 = vpack.c.bf16 %v429, %v428
    %v446 = vpack.c.bf16 %v431, %v430
    %v447 = vpack.c.bf16 %v433, %v432
    %v448 = vpack.c.bf16 %v435, %v434
    %v449 = vpack.c.bf16 %v437, %v436
    %v450 = vpack.c.bf16 %v439, %v438
    %v451 = vpack.c.bf16 %v441, %v440
    %452 = vmatpush.bf16.msra.mxu0 %v451
    %453 = vmatpush.bf16.msra.mxu0 %v450
    %454 = vmatpush.bf16.msra.mxu0 %v449
    %455 = vmatpush.bf16.msra.mxu0 %v448
    %456 = vmatpush.bf16.msra.mxu0 %v447
    %457 = vmatpush.bf16.msra.mxu0 %v446
    %458 = vmatpush.bf16.msra.mxu0 %v445
    %459 = vmatpush.bf16.msra.mxu0 %v444
    %460 = vmatmul.bf16.gmra.mxu0 %v443
    %v461 = vpop.f32.mrf.mxu0
    %v462 = vadd.f32 0.0, %v461
    %v463 = vpop.f32.mrf.mxu0
    %464 = vdwg.mxu0
    %v465 = vadd.f32 %v442, %v462
    %466 = vst [vmem:[#allocation3] sm:$0xff] %v465
  $region41: #{mygcn_forward.3} parent=0 // pred_fallthru
    _
  // Predicated region
  $region42: #{mygcn_forward.3} parent=0 // pred_check
    _
  $region43: #{mygcn_forward.3} parent=0 // pred_check_branch
    %468 = sbr.rel (%p28) target = $region45
  $region44: #{mygcn_forward.3} parent=0 // pred_region
    %v469 = vld [vmem:[#allocation3] sm:$0xff]
    %v470 = vld [vmem:[%s5] sm:$0xf]
    %v471 = vld [vmem:[%s5 + $0x4] sm:$0xf]
    %v472 = vld [vmem:[%s5 + $0x8] sm:$0xf]
    %v473 = vld [vmem:[%s5 + $0xc] sm:$0xf]
    %v474 = vld [vmem:[%s5 + $0x10] sm:$0xf]
    %v475 = vld [vmem:[%s5 + $0x14] sm:$0xf]
    %v476 = vld [vmem:[%s5 + $0x18] sm:$0xf]
    %v477 = vld [vmem:[%s5 + $0x1c] sm:$0xf]
    %v478 = vld [vmem:[%s5 + $0x20] sm:$0xf]
    %v479 = vld [vmem:[%s5 + $0x24] sm:$0xf]
    %v480 = vld [vmem:[%s5 + $0x28] sm:$0xf]
    %v481 = vld [vmem:[%s5 + $0x2c] sm:$0xf]
    %v482 = vld [vmem:[%s5 + $0x30] sm:$0xf]
    %v483 = vld [vmem:[%s5 + $0x34] sm:$0xf]
    %v484 = vld [vmem:[%s5 + $0x38] sm:$0xf]
    %v485 = vld [vmem:[%s5 + $0x3c] sm:$0xf]
    %v486 = vunpack.c.l.bf16 %v470
    %v487 = vunpack.c.l.bf16 %v471
    %v488 = vunpack.c.l.bf16 %v472
    %v489 = vunpack.c.l.bf16 %v473
    %v490 = vunpack.c.l.bf16 %v474
    %v491 = vunpack.c.l.bf16 %v475
    %v492 = vunpack.c.l.bf16 %v476
    %v493 = vunpack.c.l.bf16 %v477
    %v494 = vunpack.c.l.bf16 %v478
    %v495 = vunpack.c.l.bf16 %v479
    %v496 = vunpack.c.l.bf16 %v480
    %v497 = vunpack.c.l.bf16 %v481
    %v498 = vunpack.c.l.bf16 %v482
    %v499 = vunpack.c.l.bf16 %v483
    %v500 = vunpack.c.l.bf16 %v484
    %v501 = vunpack.c.l.bf16 %v485
    %v502 = vld [vmem:[%s6] sm:$0x1]
    %v504 = vperm.slane %v502, 0
    %506 = vmatpush.msra.mxu0 %v501
    %507 = vmatpush.msra.mxu0 %v500
    %508 = vmatpush.msra.mxu0 %v499
    %509 = vmatpush.msra.mxu0 %v498
    %510 = vmatpush.msra.mxu0 %v497
    %511 = vmatpush.msra.mxu0 %v496
    %512 = vmatpush.msra.mxu0 %v495
    %513 = vmatpush.msra.mxu0 %v494
    %514 = vmatpush.msra.mxu0 %v493
    %515 = vmatpush.msra.mxu0 %v492
    %516 = vmatpush.msra.mxu0 %v491
    %517 = vmatpush.msra.mxu0 %v490
    %518 = vmatpush.msra.mxu0 %v489
    %519 = vmatpush.msra.mxu0 %v488
    %520 = vmatpush.msra.mxu0 %v487
    %521 = vmatpush.msra.mxu0 %v486
    %522 = vmatmul.f32.gmra.mxu0 %v469
    %v523 = vpop.f32.mrf.mxu0
    %v524 = vadd.f32 %v504, %v523
    %525 = vdwg.mxu0
    %526 = vst [vmem:[%s7] sm:$0xff] %v524
  $region45: #{mygcn_forward.3} parent=0 // pred_fallthru
    _
  // Predicated region
  $region46: #{mygcn_forward.3} parent=0 // pred_check
    _
  $region47: #{mygcn_forward.3} parent=0 // pred_check_branch
    %528 = sbr.rel (0) target = $region49
  $region48: #{mygcn_forward.3} parent=0 // pred_region
    _
  $region49: #{mygcn_forward.3} parent=0 // pred_fallthru
    _
  // Predicated region
  $region50: #{mygcn_forward.3} parent=0 // pred_check
    _
  $region51: #{mygcn_forward.3} parent=0 // pred_check_branch
    %530 = sbr.rel (0) target = $region53
  $region52: #{mygcn_forward.3} parent=0 // pred_region
    _
  $region53: #{mygcn_forward.3} parent=0 // pred_fallthru
    _

</llo_original>
